<compile_context>
chip_gen: v5e
topology: v5e:2x2
jax: 0.10.0
libtpu: 0.0.40
codegen_flags: <defaults>
</compile_context>

<pallas_src>
import jax
import jax.numpy as jnp
from jax.experimental import pallas as pl
from jax.experimental.pallas import tpu as pltpu

LEAK = 0.2  # LeakyReLU negative slope


def _leaky(x):
    return jnp.where(x > 0, x, LEAK * x)


def _round_up(x, m):
    return (x + m - 1) // m * m


# ---------------------------------------------------------------------------
# Kernel: three (x @ W' + b, LeakyReLU) stages on one batch tile.
# Matmuls run on the MXU with f32 accumulation; bias add + LeakyReLU stay f32
# on the VPU (v5e has no bf16 VPU path).
# NOTE(v5e/v6e): if profiling shows MXU idle between stages (MRF drain), the
# tm rows can be split into two half-tiles and the chains interleaved.
def decoder_kernel(z_ref, w1_ref, b1_ref, w2_ref, b2_ref, w3_ref, b3_ref,
                   out_ref):
    h = jnp.dot(z_ref[...], w1_ref[...],
                preferred_element_type=jnp.float32) + b1_ref[...]
    h = _leaky(h)
    # TODO(synk): nn.Dropout treated as identity (inference / eval mode).
    h = jnp.dot(h.astype(w2_ref.dtype), w2_ref[...],
                preferred_element_type=jnp.float32) + b2_ref[...]
    h = _leaky(h)
    h = jnp.dot(h.astype(w3_ref.dtype), w3_ref[...],
                preferred_element_type=jnp.float32) + b3_ref[...]
    out_ref[...] = _leaky(h).astype(out_ref.dtype)


# ---------------------------------------------------------------------------
def _physical_vmem_bytes():
    """Generation-aware VMEM size; conservative fallback = v7x per-TC 64 MiB."""
    try:
        info = pltpu.get_tpu_info()
        v = getattr(info, "vmem_capacity_bytes", None)
        if v:
            return int(v)
    except Exception:
        pass
    return 64 << 20


def fuse_params(adj1_inv, adj2_inv, adj3_inv, params, *, use_bf16=True):
    """One-time host-side algebraic fusion + lane padding + dtype cast.

    Returns (fused, meta). Call once when weights/adjacencies are static and
    reuse across decoder_forward() calls.
    """
    f32 = jnp.float32
    w1f = adj3_inv.astype(f32).T @ params["w1t"].astype(f32)   # (H,  T3)
    w2f = adj2_inv.astype(f32).T @ params["w2t"].astype(f32)   # (T3, T2)
    w3f = adj1_inv.astype(f32).T @ params["w3t"].astype(f32)   # (T2, T1)
    b1 = params["b1"].astype(f32).reshape(1, -1)
    b2 = params["b2"].astype(f32).reshape(1, -1)
    b3 = params["b3"].astype(f32).reshape(1, -1)
    T3, T2, T1 = w1f.shape[1], w2f.shape[1], w3f.shape[1]
    T3p, T2p, T1p = (_round_up(t, 128) for t in (T3, T2, T1))

    # Zero-pad stage output widths to 128 lanes (lane-dense stores / layouts).
    # Semantics preserved: padded pre-activations are exactly 0, LeakyReLU(0)=0,
    # and the padded rows of the next weight are zero.
    w1f = jnp.pad(w1f, ((0, 0), (0, T3p - T3)))
    b1 = jnp.pad(b1, ((0, 0), (0, T3p - T3)))
    w2f = jnp.pad(w2f, ((0, T3p - T3), (0, T2p - T2)))
    b2 = jnp.pad(b2, ((0, 0), (0, T2p - T2)))
    w3f = jnp.pad(w3f, ((0, T2p - T2), (0, T1p - T1)))
    b3 = jnp.pad(b3, ((0, 0), (0, T1p - T1)))

    wdt = jnp.bfloat16 if use_bf16 else f32
    fused = {"w1": w1f.astype(wdt), "b1": b1,
             "w2": w2f.astype(wdt), "b2": b2,
             "w3": w3f.astype(wdt), "b3": b3}
    meta = {"T1": T1, "in_dtype": wdt}
    return fused, meta


def _choose_tm(batch, sublane, const_bytes, widths, in_itemsize, budget):
    """Largest batch tile (<=512 rows) fitting the VMEM budget.

    No split-into->=2-steps heuristic: small batches run as ONE grid step;
    only batches larger than the cap are tiled (per-step overhead ~0.35us).
    """
    bp = _round_up(batch, sublane)
    Hd, T3p, T2p, T1p = widths
    for cap in (512, 256, 128, 64, 32, 16, 8):
        tm = min(_round_up(cap, sublane), bp)
        stream = 2 * tm * Hd * in_itemsize + 2 * tm * T1p * 4   # dbl-buffered tiles
        interm = tm * (T3p + T2p) * 4                           # h activations (f32)
        if const_bytes + stream + interm + (2 << 20) <= budget:
            return tm
    return min(_round_up(8, sublane), bp)


def decoder_forward(z, fused, meta, *, tm=None):
    """Run the fused Pallas kernel.  z: (B, H) -> (B, T1) float32."""
    f32 = jnp.float32
    in_dtype = meta["in_dtype"]
    T1 = meta["T1"]
    w1, b1 = fused["w1"], fused["b1"]
    w2, b2 = fused["w2"], fused["b2"]
    w3, b3 = fused["w3"], fused["b3"]
    H, T3p = w1.shape
    T2p = w2.shape[1]
    T1p = w3.shape[1]

    B = z.shape[0]
    zc = z.astype(in_dtype)

    w_itemsize = jnp.dtype(in_dtype).itemsize
    sublane = 16 if jnp.dtype(in_dtype) == jnp.dtype(jnp.bfloat16) else 8

    phys = _physical_vmem_bytes()
    budget = int(phys * 0.75)  # leave headroom for compiler scratch / spill

    # Size with double-buffered constants (worst case, fallback path).
    const_bytes = 2 * ((w1.size + w2.size + w3.size) * w_itemsize
                       + (b1.size + b2.size + b3.size) * 4)

    if tm is None:
        tm = _choose_tm(B, sublane, const_bytes, (H, T3p, T2p, T1p),
                        w_itemsize, budget)
    Bp = _round_up(B, tm)
    if Bp != B:
        zc = jnp.pad(zc, ((0, Bp - B), (0, 0)))

    needed = (const_bytes
              + 2 * (tm * H * w_itemsize + tm * T1p * 4)   # z / out tiles
              + tm * (T3p + T2p) * 4                       # intermediates
              + (4 << 20))                                 # slack
    vmem_limit = int(min(max(needed, 16 << 20), budget))

    def call(single_buffer_consts):
        if single_buffer_consts:
            # Grid-invariant operands: single-buffer (no benefit from
            # double-buffering something that is never re-fetched).
            const = lambda shape: pl.BlockSpec(shape, lambda i: (0, 0),
                                               pipeline_mode=pl.Buffered(1))
        else:
            const = lambda shape: pl.BlockSpec(shape, lambda i: (0, 0))

        grid_spec = pltpu.PrefetchScalarGridSpec(
            num_scalar_prefetch=0,
            grid=(Bp // tm,),
            in_specs=[
                pl.BlockSpec((tm, H), lambda i: (i, 0)),   # z (batch-tiled)
                const((H, T3p)), const((1, T3p)),          # fused W1, b1
                const((T3p, T2p)), const((1, T2p)),        # fused W2, b2
                const((T2p, T1p)), const((1, T1p)),        # fused W3, b3
            ],
            out_specs=pl.BlockSpec((tm, T1p), lambda i: (i, 0)),
        )
        return pl.pallas_call(
            decoder_kernel,
            out_shape=jax.ShapeDtypeStruct((Bp, T1p), f32),
            grid_spec=grid_spec,
            compiler_params=pltpu.CompilerParams(
                dimension_semantics=("parallel",),
                vmem_limit_bytes=vmem_limit),
        )(zc, w1, b1, w2, b2, w3, b3)

    try:
        out = jax.block_until_ready(call(True))
    except Exception:
        # Fallback if single-buffered pipeline_mode is rejected by this
        # jax/Mosaic version: plain (double-buffered) constant specs.
        out = call(False)

    return out[:B, :T1]


def decoder_block(z, adj1_inv, adj2_inv, adj3_inv, params, *, tm=None,
                  use_bf16=True):
    """Convenience wrapper: fuse + run. For static weights/adjacencies, call
    fuse_params() once and reuse the result with decoder_forward()."""
    fused, meta = fuse_params(adj1_inv, adj2_inv, adj3_inv, params,
                              use_bf16=use_bf16)
    return decoder_forward(z.astype(jnp.float32), fused, meta, tm=tm)


# ---------------------------------------------------------------------------
def reference(z, adj1_inv, adj2_inv, adj3_inv, params):
    """Pure-JAX reference matching the PyTorch forward (eval mode), unfused."""
    f32 = jnp.float32
    z = z.astype(f32)
    z1 = (adj3_inv.astype(f32) @ z.T).T
    h1 = _leaky(z1 @ params["w1t"] + params["b1"])
    z2 = (adj2_inv.astype(f32) @ h1.T).T
    h2 = _leaky(z2 @ params["w2t"] + params["b2"])
    z3 = (adj1_inv.astype(f32) @ h2.T).T
    out = _leaky(z3 @ params["w3t"] + params["b3"])
    return out


def init_params(key, hidden_num, topic_num_3, topic_num_2, topic_num_1):
    """Deterministic synthetic parameters. PyTorch Linear stores W as (out,in);
    we keep that convention then pre-transpose for the kernel. Layers 1 & 2
    are constrained to positive weights (abs) per the module's __init__."""
    k1, k2, k3, k4, k5, k6 = jax.random.split(key, 6)
    scale = 0.1
    w1 = jnp.abs(jax.random.normal(k1, (topic_num_3, hidden_num), jnp.float32)) * scale
    b1 = jax.random.normal(k2, (topic_num_3,), jnp.float32) * scale
    w2 = jnp.abs(jax.random.normal(k3, (topic_num_2, topic_num_3), jnp.float32)) * scale
    b2 = jax.random.normal(k4, (topic_num_2,), jnp.float32) * scale
    w3 = jax.random.normal(k5, (topic_num_1, topic_num_2), jnp.float32) * scale
    b3 = jax.random.normal(k6, (topic_num_1,), jnp.float32) * scale
    return {
        "w1t": w1.T, "b1": b1.reshape(1, -1),
        "w2t": w2.T, "b2": b2.reshape(1, -1),
        "w3t": w3.T, "b3": b3.reshape(1, -1),
    }


if __name__ == "__main__":
    # Small, shape-consistent sizes (T3=64 exercises the lane-padding path):
    B, hidden_num = 16, 32
    topic_num_3, topic_num_2, topic_num_1 = 64, 128, 256

    key = jax.random.PRNGKey(0)
    kz, ka1, ka2, ka3, kp = jax.random.split(key, 5)

    z = jax.random.normal(kz, (B, hidden_num), jnp.float32)
    adj3_inv = jax.random.normal(ka3, (hidden_num, hidden_num), jnp.float32) * 0.1
    adj2_inv = jax.random.normal(ka2, (topic_num_3, topic_num_3), jnp.float32) * 0.1
    adj1_inv = jax.random.normal(ka1, (topic_num_2, topic_num_2), jnp.float32) * 0.1

    params = init_params(kp, hidden_num, topic_num_3, topic_num_2, topic_num_1)
    ref = reference(z, adj1_inv, adj2_inv, adj3_inv, params)

    # f32 path: validates the host-side algebraic fusion at tight tolerance.
    out_f32 = decoder_block(z, adj1_inv, adj2_inv, adj3_inv, params,
                            use_bf16=False)
    out_f32 = jax.block_until_ready(out_f32)
    assert out_f32.shape == (B, topic_num_1)
    assert jnp.allclose(out_f32, ref, atol=2e-4, rtol=2e-4), "f32 mismatch"

    # Default bf16-matmul path (f32 accumulation): looser tolerance.
    out_bf16 = decoder_block(z, adj1_inv, adj2_inv, adj3_inv, params)
    out_bf16 = jax.block_until_ready(out_bf16)
    assert out_bf16.shape == (B, topic_num_1)
    assert jnp.allclose(out_bf16, ref, atol=5e-2, rtol=5e-2), "bf16 mismatch"

    print("KERNEL_OK")
</pallas_src>

<mosaic_0001>
module attributes {stable_mosaic.version = 11 : i64} {
  func.func @decoder_kernel(%arg0: i32, %arg1: memref<16x32xf32, #tpu.memory_space<vmem>>, %arg2: memref<32x128xf32, #tpu.memory_space<vmem>>, %arg3: memref<1x128xf32, #tpu.memory_space<vmem>>, %arg4: memref<128x128xf32, #tpu.memory_space<vmem>>, %arg5: memref<1x128xf32, #tpu.memory_space<vmem>>, %arg6: memref<128x256xf32, #tpu.memory_space<vmem>>, %arg7: memref<1x256xf32, #tpu.memory_space<vmem>>, %arg8: memref<16x256xf32, #tpu.memory_space<vmem>>) attributes {dimension_semantics = [#tpu.dimension_semantics<parallel>], iteration_bounds = array<i64: 1>, scalar_prefetch = 0 : i64, scratch_operands = 0 : i64, tpu.core_type = #tpu.core_type<tc>, window_params = [{transform_indices = @transform_0, window_bounds = array<i64: 16, 32>}, {pipeline_mode = #tpu.pipeline_mode<synchronous>, transform_indices = @transform_1, window_bounds = array<i64: 32, 128>}, {pipeline_mode = #tpu.pipeline_mode<synchronous>, transform_indices = @transform_2, window_bounds = array<i64: 1, 128>}, {pipeline_mode = #tpu.pipeline_mode<synchronous>, transform_indices = @transform_3, window_bounds = array<i64: 128, 128>}, {pipeline_mode = #tpu.pipeline_mode<synchronous>, transform_indices = @transform_4, window_bounds = array<i64: 1, 128>}, {pipeline_mode = #tpu.pipeline_mode<synchronous>, transform_indices = @transform_5, window_bounds = array<i64: 128, 256>}, {pipeline_mode = #tpu.pipeline_mode<synchronous>, transform_indices = @transform_6, window_bounds = array<i64: 1, 256>}, {transform_indices = @transform_7, window_bounds = array<i64: 16, 256>}]} {
    %c0 = arith.constant 0 : index
    %c0_0 = arith.constant 0 : index
    %0 = vector.load %arg1[%c0, %c0_0] : memref<16x32xf32, #tpu.memory_space<vmem>>, vector<16x32xf32>
    %c0_1 = arith.constant 0 : index
    %c0_2 = arith.constant 0 : index
    %1 = vector.load %arg2[%c0_1, %c0_2] : memref<32x128xf32, #tpu.memory_space<vmem>>, vector<32x128xf32>
    %cst = arith.constant dense<0.000000e+00> : vector<16x128xf32>
    %2 = tpu.matmul %0, %1, %cst {dimension_numbers = #tpu.dot_dimension_numbers<[1], [0], [0], [1], [0, 0, 1, 1], [], []>} : vector<16x32xf32>, vector<32x128xf32>, vector<16x128xf32> -> vector<16x128xf32>
    %c0_3 = arith.constant 0 : index
    %c0_4 = arith.constant 0 : index
    %3 = vector.load %arg3[%c0_3, %c0_4] : memref<1x128xf32, #tpu.memory_space<vmem>>, vector<1x128xf32>
    %4 = vector.broadcast %3 : vector<1x128xf32> to vector<16x128xf32>
    %5 = arith.addf %2, %4 : vector<16x128xf32>
    %cst_5 = arith.constant 0.000000e+00 : f32
    %6 = vector.broadcast %cst_5 : f32 to vector<16x128xf32>
    %7 = arith.cmpf ogt, %5, %6 : vector<16x128xf32>
    %cst_6 = arith.constant 2.000000e-01 : f32
    %8 = vector.broadcast %cst_6 : f32 to vector<16x128xf32>
    %9 = arith.mulf %8, %5 : vector<16x128xf32>
    %10 = arith.select %7, %5, %9 : vector<16x128xi1>, vector<16x128xf32>
    %c0_7 = arith.constant 0 : index
    %c0_8 = arith.constant 0 : index
    %11 = vector.load %arg4[%c0_7, %c0_8] : memref<128x128xf32, #tpu.memory_space<vmem>>, vector<128x128xf32>
    %cst_9 = arith.constant dense<0.000000e+00> : vector<16x128xf32>
    %12 = tpu.matmul %10, %11, %cst_9 {dimension_numbers = #tpu.dot_dimension_numbers<[1], [0], [0], [1], [0, 0, 1, 1], [], []>} : vector<16x128xf32>, vector<128x128xf32>, vector<16x128xf32> -> vector<16x128xf32>
    %c0_10 = arith.constant 0 : index
    %c0_11 = arith.constant 0 : index
    %13 = vector.load %arg5[%c0_10, %c0_11] : memref<1x128xf32, #tpu.memory_space<vmem>>, vector<1x128xf32>
    %14 = vector.broadcast %13 : vector<1x128xf32> to vector<16x128xf32>
    %15 = arith.addf %12, %14 : vector<16x128xf32>
    %cst_12 = arith.constant 0.000000e+00 : f32
    %16 = vector.broadcast %cst_12 : f32 to vector<16x128xf32>
    %17 = arith.cmpf ogt, %15, %16 : vector<16x128xf32>
    %cst_13 = arith.constant 2.000000e-01 : f32
    %18 = vector.broadcast %cst_13 : f32 to vector<16x128xf32>
    %19 = arith.mulf %18, %15 : vector<16x128xf32>
    %20 = arith.select %17, %15, %19 : vector<16x128xi1>, vector<16x128xf32>
    %c0_14 = arith.constant 0 : index
    %c0_15 = arith.constant 0 : index
    %21 = vector.load %arg6[%c0_14, %c0_15] : memref<128x256xf32, #tpu.memory_space<vmem>>, vector<128x256xf32>
    %cst_16 = arith.constant dense<0.000000e+00> : vector<16x256xf32>
    %22 = tpu.matmul %20, %21, %cst_16 {dimension_numbers = #tpu.dot_dimension_numbers<[1], [0], [0], [1], [0, 0, 1, 1], [], []>} : vector<16x128xf32>, vector<128x256xf32>, vector<16x256xf32> -> vector<16x256xf32>
    %c0_17 = arith.constant 0 : index
    %c0_18 = arith.constant 0 : index
    %23 = vector.load %arg7[%c0_17, %c0_18] : memref<1x256xf32, #tpu.memory_space<vmem>>, vector<1x256xf32>
    %24 = vector.broadcast %23 : vector<1x256xf32> to vector<16x256xf32>
    %25 = arith.addf %22, %24 : vector<16x256xf32>
    %cst_19 = arith.constant 0.000000e+00 : f32
    %26 = vector.broadcast %cst_19 : f32 to vector<16x256xf32>
    %27 = arith.cmpf ogt, %25, %26 : vector<16x256xf32>
    %cst_20 = arith.constant 2.000000e-01 : f32
    %28 = vector.broadcast %cst_20 : f32 to vector<16x256xf32>
    %29 = arith.mulf %28, %25 : vector<16x256xf32>
    %30 = arith.select %27, %25, %29 : vector<16x256xi1>, vector<16x256xf32>
    %c0_21 = arith.constant 0 : index
    %c0_22 = arith.constant 0 : index
    %31 = vector.load %arg8[%c0_21, %c0_22] : memref<16x256xf32, #tpu.memory_space<vmem>>, vector<16x256xf32>
    tpu.vector_store %arg8[%c0_21, %c0_22], %30 {strides = array<i32>} : memref<16x256xf32, #tpu.memory_space<vmem>>, vector<16x256xf32>,
    return
  }
  func.func @transform_0(%arg0: i32) -> (i32, i32) {
    %c0_i32 = arith.constant 0 : i32
    %c0_i32_0 = arith.constant 0 : i32
    return %arg0, %c0_i32 : i32, i32
  }
  func.func @transform_1(%arg0: i32) -> (i32, i32) {
    %c0_i32 = arith.constant 0 : i32
    %c0_i32_0 = arith.constant 0 : i32
    %c0_i32_1 = arith.constant 0 : i32
    return %c0_i32, %c0_i32_0 : i32, i32
  }
  func.func @transform_2(%arg0: i32) -> (i32, i32) {
    %c0_i32 = arith.constant 0 : i32
    %c0_i32_0 = arith.constant 0 : i32
    %c0_i32_1 = arith.constant 0 : i32
    return %c0_i32, %c0_i32_0 : i32, i32
  }
  func.func @transform_3(%arg0: i32) -> (i32, i32) {
    %c0_i32 = arith.constant 0 : i32
    %c0_i32_0 = arith.constant 0 : i32
    %c0_i32_1 = arith.constant 0 : i32
    return %c0_i32, %c0_i32_0 : i32, i32
  }
  func.func @transform_4(%arg0: i32) -> (i32, i32) {
    %c0_i32 = arith.constant 0 : i32
    %c0_i32_0 = arith.constant 0 : i32
    %c0_i32_1 = arith.constant 0 : i32
    return %c0_i32, %c0_i32_0 : i32, i32
  }
  func.func @transform_5(%arg0: i32) -> (i32, i32) {
    %c0_i32 = arith.constant 0 : i32
    %c0_i32_0 = arith.constant 0 : i32
    %c0_i32_1 = arith.constant 0 : i32
    return %c0_i32, %c0_i32_0 : i32, i32
  }
  func.func @transform_6(%arg0: i32) -> (i32, i32) {
    %c0_i32 = arith.constant 0 : i32
    %c0_i32_0 = arith.constant 0 : i32
    %c0_i32_1 = arith.constant 0 : i32
    return %c0_i32, %c0_i32_0 : i32, i32
  }
  func.func @transform_7(%arg0: i32) -> (i32, i32) {
    %c0_i32 = arith.constant 0 : i32
    %c0_i32_0 = arith.constant 0 : i32
    return %arg0, %c0_i32 : i32, i32
  }
}

module attributes {stable_mosaic.version = 11 : i64} {
  func.func @decoder_kernel(%arg0: i32, %arg1: memref<16x32xf32, #tpu.memory_space<vmem>>, %arg2: memref<32x128xf32, #tpu.memory_space<vmem>>, %arg3: memref<1x128xf32, #tpu.memory_space<vmem>>, %arg4: memref<128x128xf32, #tpu.memory_space<vmem>>, %arg5: memref<1x128xf32, #tpu.memory_space<vmem>>, %arg6: memref<128x256xf32, #tpu.memory_space<vmem>>, %arg7: memref<1x256xf32, #tpu.memory_space<vmem>>, %arg8: memref<16x256xf32, #tpu.memory_space<vmem>>) attributes {dimension_semantics = [#tpu.dimension_semantics<parallel>], iteration_bounds = array<i64: 1>, scalar_prefetch = 0 : i64, scratch_operands = 0 : i64, tpu.core_type = #tpu.core_type<tc>, window_params = [{transform_indices = @transform_0, window_bounds = array<i64: 16, 32>}, {pipeline_mode = #tpu.pipeline_mode<synchronous>, transform_indices = @transform_1, window_bounds = array<i64: 32, 128>}, {pipeline_mode = #tpu.pipeline_mode<synchronous>, transform_indices = @transform_2, window_bounds = array<i64: 1, 128>}, {pipeline_mode = #tpu.pipeline_mode<synchronous>, transform_indices = @transform_3, window_bounds = array<i64: 128, 128>}, {pipeline_mode = #tpu.pipeline_mode<synchronous>, transform_indices = @transform_4, window_bounds = array<i64: 1, 128>}, {pipeline_mode = #tpu.pipeline_mode<synchronous>, transform_indices = @transform_5, window_bounds = array<i64: 128, 256>}, {pipeline_mode = #tpu.pipeline_mode<synchronous>, transform_indices = @transform_6, window_bounds = array<i64: 1, 256>}, {transform_indices = @transform_7, window_bounds = array<i64: 16, 256>}]} {
    %c0 = arith.constant 0 : index
    %c0_0 = arith.constant 0 : index
    %0 = vector.load %arg1[%c0, %c0_0] : memref<16x32xf32, #tpu.memory_space<vmem>>, vector<16x32xf32>
    %c0_1 = arith.constant 0 : index
    %c0_2 = arith.constant 0 : index
    %1 = vector.load %arg2[%c0_1, %c0_2] : memref<32x128xf32, #tpu.memory_space<vmem>>, vector<32x128xf32>
    %cst = arith.constant dense<0.000000e+00> : vector<16x128xf32>
    %2 = tpu.matmul %0, %1, %cst {dimension_numbers = #tpu.dot_dimension_numbers<[1], [0], [0], [1], [0, 0, 1, 1], [], []>} : vector<16x32xf32>, vector<32x128xf32>, vector<16x128xf32> -> vector<16x128xf32>
    %c0_3 = arith.constant 0 : index
    %c0_4 = arith.constant 0 : index
    %3 = vector.load %arg3[%c0_3, %c0_4] : memref<1x128xf32, #tpu.memory_space<vmem>>, vector<1x128xf32>
    %4 = vector.broadcast %3 : vector<1x128xf32> to vector<16x128xf32>
    %5 = arith.addf %2, %4 : vector<16x128xf32>
    %cst_5 = arith.constant 0.000000e+00 : f32
    %6 = vector.broadcast %cst_5 : f32 to vector<16x128xf32>
    %7 = arith.cmpf ogt, %5, %6 : vector<16x128xf32>
    %cst_6 = arith.constant 2.000000e-01 : f32
    %8 = vector.broadcast %cst_6 : f32 to vector<16x128xf32>
    %9 = arith.mulf %8, %5 : vector<16x128xf32>
    %10 = arith.select %7, %5, %9 : vector<16x128xi1>, vector<16x128xf32>
    %c0_7 = arith.constant 0 : index
    %c0_8 = arith.constant 0 : index
    %11 = vector.load %arg4[%c0_7, %c0_8] : memref<128x128xf32, #tpu.memory_space<vmem>>, vector<128x128xf32>
    %cst_9 = arith.constant dense<0.000000e+00> : vector<16x128xf32>
    %12 = tpu.matmul %10, %11, %cst_9 {dimension_numbers = #tpu.dot_dimension_numbers<[1], [0], [0], [1], [0, 0, 1, 1], [], []>} : vector<16x128xf32>, vector<128x128xf32>, vector<16x128xf32> -> vector<16x128xf32>
    %c0_10 = arith.constant 0 : index
    %c0_11 = arith.constant 0 : index
    %13 = vector.load %arg5[%c0_10, %c0_11] : memref<1x128xf32, #tpu.memory_space<vmem>>, vector<1x128xf32>
    %14 = vector.broadcast %13 : vector<1x128xf32> to vector<16x128xf32>
    %15 = arith.addf %12, %14 : vector<16x128xf32>
    %cst_12 = arith.constant 0.000000e+00 : f32
    %16 = vector.broadcast %cst_12 : f32 to vector<16x128xf32>
    %17 = arith.cmpf ogt, %15, %16 : vector<16x128xf32>
    %cst_13 = arith.constant 2.000000e-01 : f32
    %18 = vector.broadcast %cst_13 : f32 to vector<16x128xf32>
    %19 = arith.mulf %18, %15 : vector<16x128xf32>
    %20 = arith.select %17, %15, %19 : vector<16x128xi1>, vector<16x128xf32>
    %c0_14 = arith.constant 0 : index
    %c0_15 = arith.constant 0 : index
    %21 = vector.load %arg6[%c0_14, %c0_15] : memref<128x256xf32, #tpu.memory_space<vmem>>, vector<128x256xf32>
    %cst_16 = arith.constant dense<0.000000e+00> : vector<16x256xf32>
    %22 = tpu.matmul %20, %21, %cst_16 {dimension_numbers = #tpu.dot_dimension_numbers<[1], [0], [0], [1], [0, 0, 1, 1], [], []>} : vector<16x128xf32>, vector<128x256xf32>, vector<16x256xf32> -> vector<16x256xf32>
    %c0_17 = arith.constant 0 : index
    %c0_18 = arith.constant 0 : index
    %23 = vector.load %arg7[%c0_17, %c0_18] : memref<1x256xf32, #tpu.memory_space<vmem>>, vector<1x256xf32>
    %24 = vector.broadcast %23 : vector<1x256xf32> to vector<16x256xf32>
    %25 = arith.addf %22, %24 : vector<16x256xf32>
    %cst_19 = arith.constant 0.000000e+00 : f32
    %26 = vector.broadcast %cst_19 : f32 to vector<16x256xf32>
    %27 = arith.cmpf ogt, %25, %26 : vector<16x256xf32>
    %cst_20 = arith.constant 2.000000e-01 : f32
    %28 = vector.broadcast %cst_20 : f32 to vector<16x256xf32>
    %29 = arith.mulf %28, %25 : vector<16x256xf32>
    %30 = arith.select %27, %25, %29 : vector<16x256xi1>, vector<16x256xf32>
    %c0_21 = arith.constant 0 : index
    %c0_22 = arith.constant 0 : index
    %31 = vector.load %arg8[%c0_21, %c0_22] : memref<16x256xf32, #tpu.memory_space<vmem>>, vector<16x256xf32>
    tpu.vector_store %arg8[%c0_21, %c0_22], %30 {strides = array<i32>} : memref<16x256xf32, #tpu.memory_space<vmem>>, vector<16x256xf32>,
    return
  }
  func.func @transform_0(%arg0: i32) -> (i32, i32) {
    %c0_i32 = arith.constant 0 : i32
    %c0_i32_0 = arith.constant 0 : i32
    return %arg0, %c0_i32 : i32, i32
  }
  func.func @transform_1(%arg0: i32) -> (i32, i32) {
    %c0_i32 = arith.constant 0 : i32
    %c0_i32_0 = arith.constant 0 : i32
    %c0_i32_1 = arith.constant 0 : i32
    return %c0_i32, %c0_i32_0 : i32, i32
  }
  func.func @transform_2(%arg0: i32) -> (i32, i32) {
    %c0_i32 = arith.constant 0 : i32
    %c0_i32_0 = arith.constant 0 : i32
    %c0_i32_1 = arith.constant 0 : i32
    return %c0_i32, %c0_i32_0 : i32, i32
  }
  func.func @transform_3(%arg0: i32) -> (i32, i32) {
    %c0_i32 = arith.constant 0 : i32
    %c0_i32_0 = arith.constant 0 : i32
    %c0_i32_1 = arith.constant 0 : i32
    return %c0_i32, %c0_i32_0 : i32, i32
  }
  func.func @transform_4(%arg0: i32) -> (i32, i32) {
    %c0_i32 = arith.constant 0 : i32
    %c0_i32_0 = arith.constant 0 : i32
    %c0_i32_1 = arith.constant 0 : i32
    return %c0_i32, %c0_i32_0 : i32, i32
  }
  func.func @transform_5(%arg0: i32) -> (i32, i32) {
    %c0_i32 = arith.constant 0 : i32
    %c0_i32_0 = arith.constant 0 : i32
    %c0_i32_1 = arith.constant 0 : i32
    return %c0_i32, %c0_i32_0 : i32, i32
  }
  func.func @transform_6(%arg0: i32) -> (i32, i32) {
    %c0_i32 = arith.constant 0 : i32
    %c0_i32_0 = arith.constant 0 : i32
    %c0_i32_1 = arith.constant 0 : i32
    return %c0_i32, %c0_i32_0 : i32, i32
  }
  func.func @transform_7(%arg0: i32) -> (i32, i32) {
    %c0_i32 = arith.constant 0 : i32
    %c0_i32_0 = arith.constant 0 : i32
    return %arg0, %c0_i32 : i32, i32
  }
}

</mosaic_0001>

<llo_original>
// kernel: tpu_custom_call.1
$region0: #{tpu_custom_call.1}
  #allocation0 [shape = 'u32[]', space=smem, size = 0x4, offset = 0x4, fixed_abs, tag = 'smem constant byte address 0x4 - core index']
  #allocation1 [shape = 'u32[72,128]{1,0:T(1,128)}', space=vmem, size = 0x9000, scoped, tag = 'internal scratch']
  %s0 = inlined_call_operand.hbm [shape: f32[16,32], index: 0, kind: input, shape index: {}]
  %s1 = inlined_call_operand.hbm [shape: f32[32,128], index: 1, kind: input, shape index: {}]
  %s2 = inlined_call_operand.vmem [shape: f32[1,128], index: 2, kind: input, shape index: {}]
  %s3 = inlined_call_operand.hbm [shape: f32[128,128], index: 3, kind: input, shape index: {}]
  %s4 = inlined_call_operand.hbm [shape: f32[1,128], index: 4, kind: input, shape index: {}]
  %s5 = inlined_call_operand.hbm [shape: f32[128,256], index: 5, kind: input, shape index: {}]
  %s6 = inlined_call_operand.vmem [shape: f32[1,256], index: 6, kind: input, shape index: {}]
  %s7 = inlined_call_operand.hbm [shape: f32[16,256], index: 7, kind: output, shape index: {}]
  %s8 = sld [smem:[#allocation0]]
  $region58: #{tpu_custom_call.1} parent=0
    _
  %s10 = ssub.s32 1, %s8
  %s11 = scalar_select 0, %s10, %s8
  $region1: #{tpu_custom_call.1} parent=0
    #allocation2 [shape = 'u8[8192]{0}', space=vmem, size = 0x2000, scoped, tag = 'input window, operand 0, single buffered']
    #allocation3 [shape = 's32[1]{0}', space=sflag, size = 0x4, scoped, tag = 'scoped memory for tpu_custom_call.1']
    #allocation4 [shape = 's32[1]{0}', space=sflag, size = 0x4, scoped, tag = 'scoped memory for tpu_custom_call.1']
    #allocation5 [shape = 'u8[16384]{0}', space=vmem, size = 0x4000, scoped, tag = 'input window, operand 1, single buffered']
    #allocation6 [shape = 's32[1]{0}', space=sflag, size = 0x4, scoped, tag = 'scoped memory for tpu_custom_call.1']
    #allocation7 [shape = 'u8[65536]{0}', space=vmem, size = 0x10000, scoped, tag = 'input window, operand 3, single buffered']
    #allocation8 [shape = 'u8[512]{0}', space=vmem, size = 0x400, scoped, tag = 'input window, operand 4, single buffered']
    #allocation9 [shape = 's32[1]{0}', space=sflag, size = 0x4, scoped, tag = 'scoped memory for tpu_custom_call.1']
    #allocation10 [shape = 'u8[131072]{0}', space=vmem, size = 0x20000, scoped, tag = 'input window, operand 5, single buffered']
    #allocation11 [shape = 'u8[16384]{0}', space=vmem, size = 0x4000, scoped, tag = 'output window, operand 0, single buffered']
    %12 = vsyncpa [#allocation3], 0
    %13 = vsyncpa [#allocation6], 0
    %14 = vsyncpa [#allocation9], 0
    %15 = vsyncpa [#allocation4], 0
    // Predicated region
    $region2: #{tpu_custom_call.1} parent=1 // pred_check
      _
    $region3: #{tpu_custom_call.1} parent=1 // pred_check_branch
      %17 = sbr.rel (0) target = $region5
    $region4: #{tpu_custom_call.1} parent=1 // pred_region
      %19 = vsyncadd [#allocation3], 0
      %s20 = sshll.u32 %s0, 4
      %s21 = int_to_ptr.hbm [resolvable:$true] %s20
      %s22 = sshll.u32 [#allocation2], 4
      %s23 = int_to_ptr.vmem [resolvable:$true] %s22
      %28 = dma.hbm_to_vmem [thread:$0]  %s21, 256, %s23, [#allocation3], 128, 128, 8
    $region5: #{tpu_custom_call.1} parent=1 // pred_fallthru
      _
    // Predicated region
    $region6: #{tpu_custom_call.1} parent=1 // pred_check
      _
    $region7: #{tpu_custom_call.1} parent=1 // pred_check_branch
      %30 = sbr.rel (0) target = $region9
    $region8: #{tpu_custom_call.1} parent=1 // pred_region
      %32 = vsyncadd [#allocation6], 0
      %s33 = sshll.u32 %s1, 4
      %s34 = int_to_ptr.hbm [resolvable:$true] %s33
      %s35 = sshll.u32 [#allocation5], 4
      %s36 = int_to_ptr.vmem [resolvable:$true] %s35
      %41 = dma.hbm_to_vmem [thread:$0]  %s34, 512, %s36, [#allocation6], 128, 128, 8
    $region9: #{tpu_custom_call.1} parent=1 // pred_fallthru
      _
    // Predicated region
    $region10: #{tpu_custom_call.1} parent=1 // pred_check
      _
    $region11: #{tpu_custom_call.1} parent=1 // pred_check_branch
      %43 = sbr.rel (0) target = $region13
    $region12: #{tpu_custom_call.1} parent=1 // pred_region
      _
    $region13: #{tpu_custom_call.1} parent=1 // pred_fallthru
      _
    // Predicated region
    $region14: #{tpu_custom_call.1} parent=1 // pred_check
      _
    $region15: #{tpu_custom_call.1} parent=1 // pred_check_branch
      %45 = sbr.rel (0) target = $region17
    $region16: #{tpu_custom_call.1} parent=1 // pred_region
      %47 = vsyncadd [#allocation6], 0
      %s48 = sshll.u32 %s3, 4
      %s49 = int_to_ptr.hbm [resolvable:$true] %s48
      %s50 = sshll.u32 [#allocation7], 4
      %s51 = int_to_ptr.vmem [resolvable:$true] %s50
      %56 = dma.hbm_to_vmem [thread:$0]  %s49, 2048, %s51, [#allocation6], 128, 128, 8
    $region17: #{tpu_custom_call.1} parent=1 // pred_fallthru
      _
    // Predicated region
    $region18: #{tpu_custom_call.1} parent=1 // pred_check
      _
    $region19: #{tpu_custom_call.1} parent=1 // pred_check_branch
      %58 = sbr.rel (0) target = $region21
    $region20: #{tpu_custom_call.1} parent=1 // pred_region
      %60 = vsyncadd [#allocation9], 0
      %s62 = sshll.u32 %s4, 4
      %s63 = int_to_ptr.hbm [resolvable:$true] %s62
      %s64 = sshll.u32 [#allocation8], 4
      %s65 = int_to_ptr.vmem [resolvable:$true] %s64
      %67 = dma.hbm_to_vmem [thread:$0]  %s63, 16, %s65, [#allocation9]
    $region21: #{tpu_custom_call.1} parent=1 // pred_fallthru
      _
    // Predicated region
    $region22: #{tpu_custom_call.1} parent=1 // pred_check
      _
    $region23: #{tpu_custom_call.1} parent=1 // pred_check_branch
      %69 = sbr.rel (0) target = $region25
    $region24: #{tpu_custom_call.1} parent=1 // pred_region
      %71 = vsyncadd [#allocation9], 0
      %s72 = sshll.u32 %s5, 4
      %s73 = int_to_ptr.hbm [resolvable:$true] %s72
      %s74 = sshll.u32 [#allocation10], 4
      %s75 = int_to_ptr.vmem [resolvable:$true] %s74
      %80 = dma.hbm_to_vmem [thread:$0]  %s73, 4096, %s75, [#allocation9], 256, 256, 16
    $region25: #{tpu_custom_call.1} parent=1 // pred_fallthru
      _
    // Predicated region
    $region26: #{tpu_custom_call.1} parent=1 // pred_check
      _
    $region27: #{tpu_custom_call.1} parent=1 // pred_check_branch
      %82 = sbr.rel (0) target = $region29
    $region28: #{tpu_custom_call.1} parent=1 // pred_region
      _
    $region29: #{tpu_custom_call.1} parent=1 // pred_fallthru
      _
    // Predicated region
    $region30: #{tpu_custom_call.1} parent=1 // pred_check
      _
    $region31: #{tpu_custom_call.1} parent=1 // pred_check_branch
      %84 = sbr.rel (0) target = $region33
    $region32: #{tpu_custom_call.1} parent=1 // pred_region
      %86 = dma.done [#allocation3], 256
    $region33: #{tpu_custom_call.1} parent=1 // pred_fallthru
      _
    // Predicated region
    $region34: #{tpu_custom_call.1} parent=1 // pred_check
      _
    $region35: #{tpu_custom_call.1} parent=1 // pred_check_branch
      %88 = sbr.rel (0) target = $region37
    $region36: #{tpu_custom_call.1} parent=1 // pred_region
      %90 = dma.done [#allocation6], 512
    $region37: #{tpu_custom_call.1} parent=1 // pred_fallthru
      _
    // Predicated region
    $region38: #{tpu_custom_call.1} parent=1 // pred_check
      _
    $region39: #{tpu_custom_call.1} parent=1 // pred_check_branch
      %92 = sbr.rel (0) target = $region41
    $region40: #{tpu_custom_call.1} parent=1 // pred_region
      %94 = dma.done [#allocation6], 2048
    $region41: #{tpu_custom_call.1} parent=1 // pred_fallthru
      _
    // Predicated region
    $region42: #{tpu_custom_call.1} parent=1 // pred_check
      _
    $region43: #{tpu_custom_call.1} parent=1 // pred_check_branch
      %96 = sbr.rel (0) target = $region45
    $region44: #{tpu_custom_call.1} parent=1 // pred_region
      %98 = dma.done [#allocation9], 16
    $region45: #{tpu_custom_call.1} parent=1 // pred_fallthru
      _
    // Predicated region
    $region46: #{tpu_custom_call.1} parent=1 // pred_check
      _
    $region47: #{tpu_custom_call.1} parent=1 // pred_check_branch
      %100 = sbr.rel (0) target = $region49
    $region48: #{tpu_custom_call.1} parent=1 // pred_region
      %102 = dma.done [#allocation9], 4096
    $region49: #{tpu_custom_call.1} parent=1 // pred_fallthru
      _
    %v103 = vld [vmem:[#allocation2] sm:$0xff]
    %v104 = vld [vmem:[#allocation2 + $0x8] sm:$0xff]
    %v105 = vld [vmem:[#allocation5] sm:$0xff]
    %v106 = vld [vmem:[#allocation5 + $0x8] sm:$0xff]
    %v107 = vld [vmem:[#allocation5 + $0x10] sm:$0xff]
    %v108 = vld [vmem:[#allocation5 + $0x18] sm:$0xff]
    %v109 = vld [vmem:[%s2] sm:$0x1]
    %v111 = vperm.slane %v109, 0
    %vm113 = vcmask 261120
    %v115 = vsel %vm113, %v103, 0
    %v118 = vsel %vm113, %v104, 0
    %120 = vmatpush.msra.mxu0 0.0
    %121 = vmatpush.msra.mxu0 0.0
    %122 = vmatpush.msra.mxu0 0.0
    %123 = vmatpush.msra.mxu0 0.0
    %124 = vmatpush.msra.mxu0 0.0
    %125 = vmatpush.msra.mxu0 0.0
    %126 = vmatpush.msra.mxu0 0.0
    %127 = vmatpush.msra.mxu0 0.0
    %128 = vmatpush.msra.mxu0 0.0
    %129 = vmatpush.msra.mxu0 0.0
    %130 = vmatpush.msra.mxu0 0.0
    %131 = vmatpush.msra.mxu0 0.0
    %132 = vmatpush.msra.mxu0 %v108
    %133 = vmatpush.msra.mxu0 %v107
    %134 = vmatpush.msra.mxu0 %v106
    %135 = vmatpush.msra.mxu0 %v105
    %136 = vmatmul.f32.gmra.mxu0 %v115
    %v137 = vpop.f32.mrf.mxu0
    %v138 = vadd.f32 %v111, %v137
    %139 = vmatmul.f32.gmra.mxu0 %v118
    %v140 = vpop.f32.mrf.mxu0
    %v141 = vadd.f32 %v111, %v140
    %142 = vdwg.mxu0
    %vm143 = vcmp.gt.f32.partialorder %v138, 0.0
    %vm144 = vcmp.gt.f32.partialorder %v141, 0.0
    %v145 = vmul.f32 %v138, 0.2
    %v146 = vmul.f32 %v141, 0.2
    %v147 = vsel %vm143, %v138, %v145
    %v148 = vsel %vm144, %v141, %v146
    %v149 = vld [vmem:[#allocation7] sm:$0xff]
    %v150 = vld [vmem:[#allocation7 + $0x8] sm:$0xff]
    %v151 = vld [vmem:[#allocation7 + $0x10] sm:$0xff]
    %v152 = vld [vmem:[#allocation7 + $0x18] sm:$0xff]
    %v153 = vld [vmem:[#allocation7 + $0x20] sm:$0xff]
    %v154 = vld [vmem:[#allocation7 + $0x28] sm:$0xff]
    %v155 = vld [vmem:[#allocation7 + $0x30] sm:$0xff]
    %v156 = vld [vmem:[#allocation7 + $0x38] sm:$0xff]
    %v157 = vld [vmem:[#allocation7 + $0x40] sm:$0xff]
    %v158 = vld [vmem:[#allocation7 + $0x48] sm:$0xff]
    %v159 = vld [vmem:[#allocation7 + $0x50] sm:$0xff]
    %v160 = vld [vmem:[#allocation7 + $0x58] sm:$0xff]
    %v161 = vld [vmem:[#allocation7 + $0x60] sm:$0xff]
    %v162 = vld [vmem:[#allocation7 + $0x68] sm:$0xff]
    %v163 = vld [vmem:[#allocation7 + $0x70] sm:$0xff]
    %v164 = vld [vmem:[#allocation7 + $0x78] sm:$0xff]
    %v165 = vld [vmem:[#allocation8] sm:$0x1]
    %v167 = vperm.slane %v165, 0
    %169 = vmatpush.msra.mxu0 %v164
    %170 = vmatpush.msra.mxu0 %v163
    %171 = vmatpush.msra.mxu0 %v162
    %172 = vmatpush.msra.mxu0 %v161
    %173 = vmatpush.msra.mxu0 %v160
    %174 = vmatpush.msra.mxu0 %v159
    %175 = vmatpush.msra.mxu0 %v158
    %176 = vmatpush.msra.mxu0 %v157
    %177 = vmatpush.msra.mxu0 %v156
    %178 = vmatpush.msra.mxu0 %v155
    %179 = vmatpush.msra.mxu0 %v154
    %180 = vmatpush.msra.mxu0 %v153
    %181 = vmatpush.msra.mxu0 %v152
    %182 = vmatpush.msra.mxu0 %v151
    %183 = vmatpush.msra.mxu0 %v150
    %184 = vmatpush.msra.mxu0 %v149
    %185 = vmatmul.f32.gmra.mxu0 %v147
    %v186 = vpop.f32.mrf.mxu0
    %v187 = vadd.f32 %v167, %v186
    %188 = vmatmul.f32.gmra.mxu0 %v148
    %v189 = vpop.f32.mrf.mxu0
    %v190 = vadd.f32 %v167, %v189
    %191 = vdwg.mxu0
    %vm192 = vcmp.gt.f32.partialorder %v187, 0.0
    %vm193 = vcmp.gt.f32.partialorder %v190, 0.0
    %v194 = vmul.f32 %v187, 0.2
    %v195 = vmul.f32 %v190, 0.2
    %v196 = vsel %vm192, %v187, %v194
    %v197 = vsel %vm193, %v190, %v195
    %v198 = vld [vmem:[#allocation10] sm:$0xff]
    %v199 = vld [vmem:[#allocation10 + $0x8] sm:$0xff]
    %v200 = vld [vmem:[#allocation10 + $0x10] sm:$0xff]
    %v201 = vld [vmem:[#allocation10 + $0x18] sm:$0xff]
    %v202 = vld [vmem:[#allocation10 + $0x20] sm:$0xff]
    %v203 = vld [vmem:[#allocation10 + $0x28] sm:$0xff]
    %v204 = vld [vmem:[#allocation10 + $0x30] sm:$0xff]
    %v205 = vld [vmem:[#allocation10 + $0x38] sm:$0xff]
    %v206 = vld [vmem:[#allocation10 + $0x40] sm:$0xff]
    %v207 = vld [vmem:[#allocation10 + $0x48] sm:$0xff]
    %v208 = vld [vmem:[#allocation10 + $0x50] sm:$0xff]
    %v209 = vld [vmem:[#allocation10 + $0x58] sm:$0xff]
    %v210 = vld [vmem:[#allocation10 + $0x60] sm:$0xff]
    %v211 = vld [vmem:[#allocation10 + $0x68] sm:$0xff]
    %v212 = vld [vmem:[#allocation10 + $0x70] sm:$0xff]
    %v213 = vld [vmem:[#allocation10 + $0x78] sm:$0xff]
    %v214 = vld [vmem:[#allocation10 + $0x80] sm:$0xff]
    %v215 = vld [vmem:[#allocation10 + $0x88] sm:$0xff]
    %v216 = vld [vmem:[#allocation10 + $0x90] sm:$0xff]
    %v217 = vld [vmem:[#allocation10 + $0x98] sm:$0xff]
    %v218 = vld [vmem:[#allocation10 + $0xa0] sm:$0xff]
    %v219 = vld [vmem:[#allocation10 + $0xa8] sm:$0xff]
    %v220 = vld [vmem:[#allocation10 + $0xb0] sm:$0xff]
    %v221 = vld [vmem:[#allocation10 + $0xb8] sm:$0xff]
    %v222 = vld [vmem:[#allocation10 + $0xc0] sm:$0xff]
    %v223 = vld [vmem:[#allocation10 + $0xc8] sm:$0xff]
    %v224 = vld [vmem:[#allocation10 + $0xd0] sm:$0xff]
    %v225 = vld [vmem:[#allocation10 + $0xd8] sm:$0xff]
    %v226 = vld [vmem:[#allocation10 + $0xe0] sm:$0xff]
    %v227 = vld [vmem:[#allocation10 + $0xe8] sm:$0xff]
    %v228 = vld [vmem:[#allocation10 + $0xf0] sm:$0xff]
    %v229 = vld [vmem:[#allocation10 + $0xf8] sm:$0xff]
    %v230 = vld [vmem:[%s6] sm:$0x3]
    %v232 = vperm.slane %v230, 0
    %v233 = vperm.slane %v230, 1
    %236 = vmatpush.msra.mxu0 %v228
    %237 = vmatpush.msra.mxu0 %v226
    %238 = vmatpush.msra.mxu0 %v224
    %239 = vmatpush.msra.mxu0 %v222
    %240 = vmatpush.msra.mxu0 %v220
    %241 = vmatpush.msra.mxu0 %v218
    %242 = vmatpush.msra.mxu0 %v216
    %243 = vmatpush.msra.mxu0 %v214
    %244 = vmatpush.msra.mxu0 %v212
    %245 = vmatpush.msra.mxu0 %v210
    %246 = vmatpush.msra.mxu0 %v208
    %247 = vmatpush.msra.mxu0 %v206
    %248 = vmatpush.msra.mxu0 %v204
    %249 = vmatpush.msra.mxu0 %v202
    %250 = vmatpush.msra.mxu0 %v200
    %251 = vmatpush.msra.mxu0 %v198
    %252 = vmatmul.f32.gmra.mxu0 %v196
    %v253 = vpop.f32.mrf.mxu0
    %v254 = vadd.f32 %v232, %v253
    %255 = vmatmul.f32.gmra.mxu0 %v197
    %v256 = vpop.f32.mrf.mxu0
    %v257 = vadd.f32 %v232, %v256
    %258 = vdwg.mxu0
    %259 = vmatpush.msra.mxu0 %v229
    %260 = vmatpush.msra.mxu0 %v227
    %261 = vmatpush.msra.mxu0 %v225
    %262 = vmatpush.msra.mxu0 %v223
    %263 = vmatpush.msra.mxu0 %v221
    %264 = vmatpush.msra.mxu0 %v219
    %265 = vmatpush.msra.mxu0 %v217
    %266 = vmatpush.msra.mxu0 %v215
    %267 = vmatpush.msra.mxu0 %v213
    %268 = vmatpush.msra.mxu0 %v211
    %269 = vmatpush.msra.mxu0 %v209
    %270 = vmatpush.msra.mxu0 %v207
    %271 = vmatpush.msra.mxu0 %v205
    %272 = vmatpush.msra.mxu0 %v203
    %273 = vmatpush.msra.mxu0 %v201
    %274 = vmatpush.msra.mxu0 %v199
    %275 = vmatmul.f32.gmra.mxu0 %v196
    %v276 = vpop.f32.mrf.mxu0
    %v277 = vadd.f32 %v233, %v276
    %278 = vmatmul.f32.gmra.mxu0 %v197
    %v279 = vpop.f32.mrf.mxu0
    %v280 = vadd.f32 %v233, %v279
    %281 = vdwg.mxu0
    %vm282 = vcmp.gt.f32.partialorder %v254, 0.0
    %vm283 = vcmp.gt.f32.partialorder %v277, 0.0
    %vm284 = vcmp.gt.f32.partialorder %v257, 0.0
    %vm285 = vcmp.gt.f32.partialorder %v280, 0.0
    %v286 = vmul.f32 %v254, 0.2
    %v287 = vmul.f32 %v277, 0.2
    %v288 = vmul.f32 %v257, 0.2
    %v289 = vmul.f32 %v280, 0.2
    %v290 = vsel %vm282, %v254, %v286
    %v291 = vsel %vm283, %v277, %v287
    %v292 = vsel %vm284, %v257, %v288
    %v293 = vsel %vm285, %v280, %v289
    %294 = vst [vmem:[#allocation11] sm:$0xff] %v290
    %295 = vst [vmem:[#allocation11 + $0x8] sm:$0xff] %v291
    %296 = vst [vmem:[#allocation11 + $0x10] sm:$0xff] %v292
    %297 = vst [vmem:[#allocation11 + $0x18] sm:$0xff] %v293
    // Predicated region
    $region50: #{tpu_custom_call.1} parent=1 // pred_check
      _
    $region51: #{tpu_custom_call.1} parent=1 // pred_check_branch
      %299 = sbr.rel (0) target = $region53
    $region52: #{tpu_custom_call.1} parent=1 // pred_region
      %301 = vsyncadd [#allocation4], 0
      %s302 = sshll.u32 [#allocation11], 4
      %s303 = int_to_ptr.vmem [resolvable:$true] %s302
      %s304 = sshll.u32 %s7, 4
      %s305 = int_to_ptr.hbm [resolvable:$true] %s304
      %310 = dma.vmem_to_hbm [thread:$0]  %s303, 512, %s305, [#allocation4], 256, 256, 16
    $region53: #{tpu_custom_call.1} parent=1 // pred_fallthru
      _
    // Predicated region
    $region54: #{tpu_custom_call.1} parent=1 // pred_check
      _
    $region55: #{tpu_custom_call.1} parent=1 // pred_check_branch
      %312 = sbr.rel (0) target = $region57
    $region56: #{tpu_custom_call.1} parent=1 // pred_region
      %314 = dma.done [#allocation4], 512
    $region57: #{tpu_custom_call.1} parent=1 // pred_fallthru
      _
    %315 = vsyncpa [#allocation3], 1
    %316 = vsyncpa [#allocation6], 1
    %317 = vsyncpa [#allocation9], 1
    %318 = vsyncpa [#allocation4], 1

// kernel: tpu_custom_call.1
$region0: #{tpu_custom_call.1}
  #allocation0 [shape = 'u32[]', space=smem, size = 0x4, offset = 0x4, fixed_abs, tag = 'smem constant byte address 0x4 - core index']
  #allocation1 [shape = 'u32[72,128]{1,0:T(1,128)}', space=vmem, size = 0x9000, scoped, tag = 'internal scratch']
  %s0 = inlined_call_operand.hbm [shape: f32[16,32], index: 0, kind: input, shape index: {}]
  %s1 = inlined_call_operand.hbm [shape: f32[32,128], index: 1, kind: input, shape index: {}]
  %s2 = inlined_call_operand.vmem [shape: f32[1,128], index: 2, kind: input, shape index: {}]
  %s3 = inlined_call_operand.hbm [shape: f32[128,128], index: 3, kind: input, shape index: {}]
  %s4 = inlined_call_operand.hbm [shape: f32[1,128], index: 4, kind: input, shape index: {}]
  %s5 = inlined_call_operand.hbm [shape: f32[128,256], index: 5, kind: input, shape index: {}]
  %s6 = inlined_call_operand.vmem [shape: f32[1,256], index: 6, kind: input, shape index: {}]
  %s7 = inlined_call_operand.hbm [shape: f32[16,256], index: 7, kind: output, shape index: {}]
  %s8 = sld [smem:[#allocation0]]
  $region58: #{tpu_custom_call.1} parent=0
    _
  %s10 = ssub.s32 1, %s8
  %s11 = scalar_select 0, %s10, %s8
  $region1: #{tpu_custom_call.1} parent=0
    #allocation2 [shape = 'u8[8192]{0}', space=vmem, size = 0x2000, scoped, tag = 'input window, operand 0, single buffered']
    #allocation3 [shape = 's32[1]{0}', space=sflag, size = 0x4, scoped, tag = 'scoped memory for tpu_custom_call.1']
    #allocation4 [shape = 's32[1]{0}', space=sflag, size = 0x4, scoped, tag = 'scoped memory for tpu_custom_call.1']
    #allocation5 [shape = 'u8[16384]{0}', space=vmem, size = 0x4000, scoped, tag = 'input window, operand 1, single buffered']
    #allocation6 [shape = 's32[1]{0}', space=sflag, size = 0x4, scoped, tag = 'scoped memory for tpu_custom_call.1']
    #allocation7 [shape = 'u8[65536]{0}', space=vmem, size = 0x10000, scoped, tag = 'input window, operand 3, single buffered']
    #allocation8 [shape = 'u8[512]{0}', space=vmem, size = 0x400, scoped, tag = 'input window, operand 4, single buffered']
    #allocation9 [shape = 's32[1]{0}', space=sflag, size = 0x4, scoped, tag = 'scoped memory for tpu_custom_call.1']
    #allocation10 [shape = 'u8[131072]{0}', space=vmem, size = 0x20000, scoped, tag = 'input window, operand 5, single buffered']
    #allocation11 [shape = 'u8[16384]{0}', space=vmem, size = 0x4000, scoped, tag = 'output window, operand 0, single buffered']
    %12 = vsyncpa [#allocation3], 0
    %13 = vsyncpa [#allocation6], 0
    %14 = vsyncpa [#allocation9], 0
    %15 = vsyncpa [#allocation4], 0
    // Predicated region
    $region2: #{tpu_custom_call.1} parent=1 // pred_check
      _
    $region3: #{tpu_custom_call.1} parent=1 // pred_check_branch
      %17 = sbr.rel (0) target = $region5
    $region4: #{tpu_custom_call.1} parent=1 // pred_region
      %19 = vsyncadd [#allocation3], 0
      %s20 = sshll.u32 %s0, 4
      %s21 = int_to_ptr.hbm [resolvable:$true] %s20
      %s22 = sshll.u32 [#allocation2], 4
      %s23 = int_to_ptr.vmem [resolvable:$true] %s22
      %28 = dma.hbm_to_vmem [thread:$0]  %s21, 256, %s23, [#allocation3], 128, 128, 8
    $region5: #{tpu_custom_call.1} parent=1 // pred_fallthru
      _
    // Predicated region
    $region6: #{tpu_custom_call.1} parent=1 // pred_check
      _
    $region7: #{tpu_custom_call.1} parent=1 // pred_check_branch
      %30 = sbr.rel (0) target = $region9
    $region8: #{tpu_custom_call.1} parent=1 // pred_region
      %32 = vsyncadd [#allocation6], 0
      %s33 = sshll.u32 %s1, 4
      %s34 = int_to_ptr.hbm [resolvable:$true] %s33
      %s35 = sshll.u32 [#allocation5], 4
      %s36 = int_to_ptr.vmem [resolvable:$true] %s35
      %41 = dma.hbm_to_vmem [thread:$0]  %s34, 512, %s36, [#allocation6], 128, 128, 8
    $region9: #{tpu_custom_call.1} parent=1 // pred_fallthru
      _
    // Predicated region
    $region10: #{tpu_custom_call.1} parent=1 // pred_check
      _
    $region11: #{tpu_custom_call.1} parent=1 // pred_check_branch
      %43 = sbr.rel (0) target = $region13
    $region12: #{tpu_custom_call.1} parent=1 // pred_region
      _
    $region13: #{tpu_custom_call.1} parent=1 // pred_fallthru
      _
    // Predicated region
    $region14: #{tpu_custom_call.1} parent=1 // pred_check
      _
    $region15: #{tpu_custom_call.1} parent=1 // pred_check_branch
      %45 = sbr.rel (0) target = $region17
    $region16: #{tpu_custom_call.1} parent=1 // pred_region
      %47 = vsyncadd [#allocation6], 0
      %s48 = sshll.u32 %s3, 4
      %s49 = int_to_ptr.hbm [resolvable:$true] %s48
      %s50 = sshll.u32 [#allocation7], 4
      %s51 = int_to_ptr.vmem [resolvable:$true] %s50
      %56 = dma.hbm_to_vmem [thread:$0]  %s49, 2048, %s51, [#allocation6], 128, 128, 8
    $region17: #{tpu_custom_call.1} parent=1 // pred_fallthru
      _
    // Predicated region
    $region18: #{tpu_custom_call.1} parent=1 // pred_check
      _
    $region19: #{tpu_custom_call.1} parent=1 // pred_check_branch
      %58 = sbr.rel (0) target = $region21
    $region20: #{tpu_custom_call.1} parent=1 // pred_region
      %60 = vsyncadd [#allocation9], 0
      %s62 = sshll.u32 %s4, 4
      %s63 = int_to_ptr.hbm [resolvable:$true] %s62
      %s64 = sshll.u32 [#allocation8], 4
      %s65 = int_to_ptr.vmem [resolvable:$true] %s64
      %67 = dma.hbm_to_vmem [thread:$0]  %s63, 16, %s65, [#allocation9]
    $region21: #{tpu_custom_call.1} parent=1 // pred_fallthru
      _
    // Predicated region
    $region22: #{tpu_custom_call.1} parent=1 // pred_check
      _
    $region23: #{tpu_custom_call.1} parent=1 // pred_check_branch
      %69 = sbr.rel (0) target = $region25
    $region24: #{tpu_custom_call.1} parent=1 // pred_region
      %71 = vsyncadd [#allocation9], 0
      %s72 = sshll.u32 %s5, 4
      %s73 = int_to_ptr.hbm [resolvable:$true] %s72
      %s74 = sshll.u32 [#allocation10], 4
      %s75 = int_to_ptr.vmem [resolvable:$true] %s74
      %80 = dma.hbm_to_vmem [thread:$0]  %s73, 4096, %s75, [#allocation9], 256, 256, 16
    $region25: #{tpu_custom_call.1} parent=1 // pred_fallthru
      _
    // Predicated region
    $region26: #{tpu_custom_call.1} parent=1 // pred_check
      _
    $region27: #{tpu_custom_call.1} parent=1 // pred_check_branch
      %82 = sbr.rel (0) target = $region29
    $region28: #{tpu_custom_call.1} parent=1 // pred_region
      _
    $region29: #{tpu_custom_call.1} parent=1 // pred_fallthru
      _
    // Predicated region
    $region30: #{tpu_custom_call.1} parent=1 // pred_check
      _
    $region31: #{tpu_custom_call.1} parent=1 // pred_check_branch
      %84 = sbr.rel (0) target = $region33
    $region32: #{tpu_custom_call.1} parent=1 // pred_region
      %86 = dma.done [#allocation3], 256
    $region33: #{tpu_custom_call.1} parent=1 // pred_fallthru
      _
    // Predicated region
    $region34: #{tpu_custom_call.1} parent=1 // pred_check
      _
    $region35: #{tpu_custom_call.1} parent=1 // pred_check_branch
      %88 = sbr.rel (0) target = $region37
    $region36: #{tpu_custom_call.1} parent=1 // pred_region
      %90 = dma.done [#allocation6], 512
    $region37: #{tpu_custom_call.1} parent=1 // pred_fallthru
      _
    // Predicated region
    $region38: #{tpu_custom_call.1} parent=1 // pred_check
      _
    $region39: #{tpu_custom_call.1} parent=1 // pred_check_branch
      %92 = sbr.rel (0) target = $region41
    $region40: #{tpu_custom_call.1} parent=1 // pred_region
      %94 = dma.done [#allocation6], 2048
    $region41: #{tpu_custom_call.1} parent=1 // pred_fallthru
      _
    // Predicated region
    $region42: #{tpu_custom_call.1} parent=1 // pred_check
      _
    $region43: #{tpu_custom_call.1} parent=1 // pred_check_branch
      %96 = sbr.rel (0) target = $region45
    $region44: #{tpu_custom_call.1} parent=1 // pred_region
      %98 = dma.done [#allocation9], 16
    $region45: #{tpu_custom_call.1} parent=1 // pred_fallthru
      _
    // Predicated region
    $region46: #{tpu_custom_call.1} parent=1 // pred_check
      _
    $region47: #{tpu_custom_call.1} parent=1 // pred_check_branch
      %100 = sbr.rel (0) target = $region49
    $region48: #{tpu_custom_call.1} parent=1 // pred_region
      %102 = dma.done [#allocation9], 4096
    $region49: #{tpu_custom_call.1} parent=1 // pred_fallthru
      _
    %v103 = vld [vmem:[#allocation2] sm:$0xff]
    %v104 = vld [vmem:[#allocation2 + $0x8] sm:$0xff]
    %v105 = vld [vmem:[#allocation5] sm:$0xff]
    %v106 = vld [vmem:[#allocation5 + $0x8] sm:$0xff]
    %v107 = vld [vmem:[#allocation5 + $0x10] sm:$0xff]
    %v108 = vld [vmem:[#allocation5 + $0x18] sm:$0xff]
    %v109 = vld [vmem:[%s2] sm:$0x1]
    %v111 = vperm.slane %v109, 0
    %vm113 = vcmask 261120
    %v115 = vsel %vm113, %v103, 0
    %v118 = vsel %vm113, %v104, 0
    %120 = vmatpush.msra.mxu0 0.0
    %121 = vmatpush.msra.mxu0 0.0
    %122 = vmatpush.msra.mxu0 0.0
    %123 = vmatpush.msra.mxu0 0.0
    %124 = vmatpush.msra.mxu0 0.0
    %125 = vmatpush.msra.mxu0 0.0
    %126 = vmatpush.msra.mxu0 0.0
    %127 = vmatpush.msra.mxu0 0.0
    %128 = vmatpush.msra.mxu0 0.0
    %129 = vmatpush.msra.mxu0 0.0
    %130 = vmatpush.msra.mxu0 0.0
    %131 = vmatpush.msra.mxu0 0.0
    %132 = vmatpush.msra.mxu0 %v108
    %133 = vmatpush.msra.mxu0 %v107
    %134 = vmatpush.msra.mxu0 %v106
    %135 = vmatpush.msra.mxu0 %v105
    %136 = vmatmul.f32.gmra.mxu0 %v115
    %v137 = vpop.f32.mrf.mxu0
    %v138 = vadd.f32 %v111, %v137
    %139 = vmatmul.f32.gmra.mxu0 %v118
    %v140 = vpop.f32.mrf.mxu0
    %v141 = vadd.f32 %v111, %v140
    %142 = vdwg.mxu0
    %vm143 = vcmp.gt.f32.partialorder %v138, 0.0
    %vm144 = vcmp.gt.f32.partialorder %v141, 0.0
    %v145 = vmul.f32 %v138, 0.2
    %v146 = vmul.f32 %v141, 0.2
    %v147 = vsel %vm143, %v138, %v145
    %v148 = vsel %vm144, %v141, %v146
    %v149 = vld [vmem:[#allocation7] sm:$0xff]
    %v150 = vld [vmem:[#allocation7 + $0x8] sm:$0xff]
    %v151 = vld [vmem:[#allocation7 + $0x10] sm:$0xff]
    %v152 = vld [vmem:[#allocation7 + $0x18] sm:$0xff]
    %v153 = vld [vmem:[#allocation7 + $0x20] sm:$0xff]
    %v154 = vld [vmem:[#allocation7 + $0x28] sm:$0xff]
    %v155 = vld [vmem:[#allocation7 + $0x30] sm:$0xff]
    %v156 = vld [vmem:[#allocation7 + $0x38] sm:$0xff]
    %v157 = vld [vmem:[#allocation7 + $0x40] sm:$0xff]
    %v158 = vld [vmem:[#allocation7 + $0x48] sm:$0xff]
    %v159 = vld [vmem:[#allocation7 + $0x50] sm:$0xff]
    %v160 = vld [vmem:[#allocation7 + $0x58] sm:$0xff]
    %v161 = vld [vmem:[#allocation7 + $0x60] sm:$0xff]
    %v162 = vld [vmem:[#allocation7 + $0x68] sm:$0xff]
    %v163 = vld [vmem:[#allocation7 + $0x70] sm:$0xff]
    %v164 = vld [vmem:[#allocation7 + $0x78] sm:$0xff]
    %v165 = vld [vmem:[#allocation8] sm:$0x1]
    %v167 = vperm.slane %v165, 0
    %169 = vmatpush.msra.mxu0 %v164
    %170 = vmatpush.msra.mxu0 %v163
    %171 = vmatpush.msra.mxu0 %v162
    %172 = vmatpush.msra.mxu0 %v161
    %173 = vmatpush.msra.mxu0 %v160
    %174 = vmatpush.msra.mxu0 %v159
    %175 = vmatpush.msra.mxu0 %v158
    %176 = vmatpush.msra.mxu0 %v157
    %177 = vmatpush.msra.mxu0 %v156
    %178 = vmatpush.msra.mxu0 %v155
    %179 = vmatpush.msra.mxu0 %v154
    %180 = vmatpush.msra.mxu0 %v153
    %181 = vmatpush.msra.mxu0 %v152
    %182 = vmatpush.msra.mxu0 %v151
    %183 = vmatpush.msra.mxu0 %v150
    %184 = vmatpush.msra.mxu0 %v149
    %185 = vmatmul.f32.gmra.mxu0 %v147
    %v186 = vpop.f32.mrf.mxu0
    %v187 = vadd.f32 %v167, %v186
    %188 = vmatmul.f32.gmra.mxu0 %v148
    %v189 = vpop.f32.mrf.mxu0
    %v190 = vadd.f32 %v167, %v189
    %191 = vdwg.mxu0
    %vm192 = vcmp.gt.f32.partialorder %v187, 0.0
    %vm193 = vcmp.gt.f32.partialorder %v190, 0.0
    %v194 = vmul.f32 %v187, 0.2
    %v195 = vmul.f32 %v190, 0.2
    %v196 = vsel %vm192, %v187, %v194
    %v197 = vsel %vm193, %v190, %v195
    %v198 = vld [vmem:[#allocation10] sm:$0xff]
    %v199 = vld [vmem:[#allocation10 + $0x8] sm:$0xff]
    %v200 = vld [vmem:[#allocation10 + $0x10] sm:$0xff]
    %v201 = vld [vmem:[#allocation10 + $0x18] sm:$0xff]
    %v202 = vld [vmem:[#allocation10 + $0x20] sm:$0xff]
    %v203 = vld [vmem:[#allocation10 + $0x28] sm:$0xff]
    %v204 = vld [vmem:[#allocation10 + $0x30] sm:$0xff]
    %v205 = vld [vmem:[#allocation10 + $0x38] sm:$0xff]
    %v206 = vld [vmem:[#allocation10 + $0x40] sm:$0xff]
    %v207 = vld [vmem:[#allocation10 + $0x48] sm:$0xff]
    %v208 = vld [vmem:[#allocation10 + $0x50] sm:$0xff]
    %v209 = vld [vmem:[#allocation10 + $0x58] sm:$0xff]
    %v210 = vld [vmem:[#allocation10 + $0x60] sm:$0xff]
    %v211 = vld [vmem:[#allocation10 + $0x68] sm:$0xff]
    %v212 = vld [vmem:[#allocation10 + $0x70] sm:$0xff]
    %v213 = vld [vmem:[#allocation10 + $0x78] sm:$0xff]
    %v214 = vld [vmem:[#allocation10 + $0x80] sm:$0xff]
    %v215 = vld [vmem:[#allocation10 + $0x88] sm:$0xff]
    %v216 = vld [vmem:[#allocation10 + $0x90] sm:$0xff]
    %v217 = vld [vmem:[#allocation10 + $0x98] sm:$0xff]
    %v218 = vld [vmem:[#allocation10 + $0xa0] sm:$0xff]
    %v219 = vld [vmem:[#allocation10 + $0xa8] sm:$0xff]
    %v220 = vld [vmem:[#allocation10 + $0xb0] sm:$0xff]
    %v221 = vld [vmem:[#allocation10 + $0xb8] sm:$0xff]
    %v222 = vld [vmem:[#allocation10 + $0xc0] sm:$0xff]
    %v223 = vld [vmem:[#allocation10 + $0xc8] sm:$0xff]
    %v224 = vld [vmem:[#allocation10 + $0xd0] sm:$0xff]
    %v225 = vld [vmem:[#allocation10 + $0xd8] sm:$0xff]
    %v226 = vld [vmem:[#allocation10 + $0xe0] sm:$0xff]
    %v227 = vld [vmem:[#allocation10 + $0xe8] sm:$0xff]
    %v228 = vld [vmem:[#allocation10 + $0xf0] sm:$0xff]
    %v229 = vld [vmem:[#allocation10 + $0xf8] sm:$0xff]
    %v230 = vld [vmem:[%s6] sm:$0x3]
    %v232 = vperm.slane %v230, 0
    %v233 = vperm.slane %v230, 1
    %236 = vmatpush.msra.mxu0 %v228
    %237 = vmatpush.msra.mxu0 %v226
    %238 = vmatpush.msra.mxu0 %v224
    %239 = vmatpush.msra.mxu0 %v222
    %240 = vmatpush.msra.mxu0 %v220
    %241 = vmatpush.msra.mxu0 %v218
    %242 = vmatpush.msra.mxu0 %v216
    %243 = vmatpush.msra.mxu0 %v214
    %244 = vmatpush.msra.mxu0 %v212
    %245 = vmatpush.msra.mxu0 %v210
    %246 = vmatpush.msra.mxu0 %v208
    %247 = vmatpush.msra.mxu0 %v206
    %248 = vmatpush.msra.mxu0 %v204
    %249 = vmatpush.msra.mxu0 %v202
    %250 = vmatpush.msra.mxu0 %v200
    %251 = vmatpush.msra.mxu0 %v198
    %252 = vmatmul.f32.gmra.mxu0 %v196
    %v253 = vpop.f32.mrf.mxu0
    %v254 = vadd.f32 %v232, %v253
    %255 = vmatmul.f32.gmra.mxu0 %v197
    %v256 = vpop.f32.mrf.mxu0
    %v257 = vadd.f32 %v232, %v256
    %258 = vdwg.mxu0
    %259 = vmatpush.msra.mxu0 %v229
    %260 = vmatpush.msra.mxu0 %v227
    %261 = vmatpush.msra.mxu0 %v225
    %262 = vmatpush.msra.mxu0 %v223
    %263 = vmatpush.msra.mxu0 %v221
    %264 = vmatpush.msra.mxu0 %v219
    %265 = vmatpush.msra.mxu0 %v217
    %266 = vmatpush.msra.mxu0 %v215
    %267 = vmatpush.msra.mxu0 %v213
    %268 = vmatpush.msra.mxu0 %v211
    %269 = vmatpush.msra.mxu0 %v209
    %270 = vmatpush.msra.mxu0 %v207
    %271 = vmatpush.msra.mxu0 %v205
    %272 = vmatpush.msra.mxu0 %v203
    %273 = vmatpush.msra.mxu0 %v201
    %274 = vmatpush.msra.mxu0 %v199
    %275 = vmatmul.f32.gmra.mxu0 %v196
    %v276 = vpop.f32.mrf.mxu0
    %v277 = vadd.f32 %v233, %v276
    %278 = vmatmul.f32.gmra.mxu0 %v197
    %v279 = vpop.f32.mrf.mxu0
    %v280 = vadd.f32 %v233, %v279
    %281 = vdwg.mxu0
    %vm282 = vcmp.gt.f32.partialorder %v254, 0.0
    %vm283 = vcmp.gt.f32.partialorder %v277, 0.0
    %vm284 = vcmp.gt.f32.partialorder %v257, 0.0
    %vm285 = vcmp.gt.f32.partialorder %v280, 0.0
    %v286 = vmul.f32 %v254, 0.2
    %v287 = vmul.f32 %v277, 0.2
    %v288 = vmul.f32 %v257, 0.2
    %v289 = vmul.f32 %v280, 0.2
    %v290 = vsel %vm282, %v254, %v286
    %v291 = vsel %vm283, %v277, %v287
    %v292 = vsel %vm284, %v257, %v288
    %v293 = vsel %vm285, %v280, %v289
    %294 = vst [vmem:[#allocation11] sm:$0xff] %v290
    %295 = vst [vmem:[#allocation11 + $0x8] sm:$0xff] %v291
    %296 = vst [vmem:[#allocation11 + $0x10] sm:$0xff] %v292
    %297 = vst [vmem:[#allocation11 + $0x18] sm:$0xff] %v293
    // Predicated region
    $region50: #{tpu_custom_call.1} parent=1 // pred_check
      _
    $region51: #{tpu_custom_call.1} parent=1 // pred_check_branch
      %299 = sbr.rel (0) target = $region53
    $region52: #{tpu_custom_call.1} parent=1 // pred_region
      %301 = vsyncadd [#allocation4], 0
      %s302 = sshll.u32 [#allocation11], 4
      %s303 = int_to_ptr.vmem [resolvable:$true] %s302
      %s304 = sshll.u32 %s7, 4
      %s305 = int_to_ptr.hbm [resolvable:$true] %s304
      %310 = dma.vmem_to_hbm [thread:$0]  %s303, 512, %s305, [#allocation4], 256, 256, 16
    $region53: #{tpu_custom_call.1} parent=1 // pred_fallthru
      _
    // Predicated region
    $region54: #{tpu_custom_call.1} parent=1 // pred_check
      _
    $region55: #{tpu_custom_call.1} parent=1 // pred_check_branch
      %312 = sbr.rel (0) target = $region57
    $region56: #{tpu_custom_call.1} parent=1 // pred_region
      %314 = dma.done [#allocation4], 512
    $region57: #{tpu_custom_call.1} parent=1 // pred_fallthru
      _
    %315 = vsyncpa [#allocation3], 1
    %316 = vsyncpa [#allocation6], 1
    %317 = vsyncpa [#allocation9], 1
    %318 = vsyncpa [#allocation4], 1

</llo_original>
